<compile_context>
chip_gen: v7x
topology: tpu7x:2x2x1
jax: 0.10.0
libtpu: 0.0.40
codegen_flags: <defaults>
</compile_context>

<pallas_src>
import functools

import jax
import jax.numpy as jnp
from jax.experimental import pallas as pl
from jax.experimental.pallas import tpu as pltpu


def _round_up(x, m):
    return (x + m - 1) // m * m


# ----------------------------- Pallas kernels -----------------------------

def _se_pool_fc_kernel(x_ref, w1_ref, w2_ref, s_ref, *, inv_hw):
    """Pass 1 (per batch b, over HW tiles t): accumulate per-channel sums of the
    (1, C, hw_tile) block into the resident (1, C, 1) accumulator; on the last
    tile finalize mean -> FC -> ReLU -> FC -> sigmoid in transposed (W @ y^T)
    form, leaving the (C, 1) sigmoid scale in s_ref."""
    t = pl.program_id(1)

    @pl.when(t == 0)
    def _():
        s_ref[...] = jnp.zeros_like(s_ref)

    # Partial per-channel sum over this HW tile (lane-axis reduce, keepdims so
    # the result stays channels-on-sublanes; f32 accumulation, no f32 tile copy).
    s_ref[...] += jnp.sum(x_ref[...], axis=2, keepdims=True, dtype=jnp.float32)

    @pl.when(t == pl.num_programs(1) - 1)
    def _():
        y_t = s_ref[0] * inv_hw                                   # (C, 1) pooled mean
        h_t = jnp.maximum(                                        # (Hp, 1) = ReLU(W1 @ y^T)
            jnp.dot(w1_ref[...], y_t, preferred_element_type=jnp.float32), 0.0)
        s_ref[0] = jax.nn.sigmoid(                                # (C, 1) = sigmoid(W2 @ h^T)
            jnp.dot(w2_ref[...], h_t, preferred_element_type=jnp.float32))


def _se_apply_kernel(x_ref, s_ref, o_ref):
    """Pass 2: out = x * scale, broadcasting the (1, C, 1) scale over the lane
    (HW) axis.  Multiply runs in the activation dtype; output last dim is a
    multiple of 128 lanes -> unmasked stores."""
    o_ref[...] = x_ref[...] * s_ref[...].astype(o_ref.dtype)


# ----------------------------- wrapper helpers -----------------------------

def _device_limits():
    """(physical VMEM bytes, per-block byte budget) with a conservative default."""
    vmem_cap = 64 << 20                      # conservative = v7x per-TC VMEM
    try:
        info = pltpu.get_tpu_info()
        vmem_cap = int(getattr(info, "vmem_capacity_bytes", vmem_cap))
    except Exception:
        pass
    budget = min(8 << 20, max(1 << 20, vmem_cap // 8))
    return vmem_cap, budget


def _pick_hw_tile(c, hw, itemsize, budget_bytes):
    """Largest multiple-of-128 divisor of hw whose (C, tile) slab fits the budget."""
    divisors = [t for t in range(128, hw + 1, 128) if hw % t == 0]
    if not divisors:
        # TODO(synk): masked ragged last tile; for now take the full HW extent.
        return hw
    fitting = [t for t in divisors if c * t * itemsize <= budget_bytes]
    return max(fitting) if fitting else min(divisors)


# ----------------------------- forward -----------------------------

def se_layer_forward(params, x_nchw, *, hw_tile=None, interpret=False):
    """SELayer forward matching the PyTorch module.  x: (B, C, H, W) -> (B, C, H, W)."""
    w1, w2 = params["w1"], params["w2"]          # (hidden, C), (C, hidden): nn.Linear layout
    B, C, H, W = x_nchw.shape
    HW = H * W
    hidden = w1.shape[0]

    x = x_nchw.reshape(B, C, HW)                 # free contiguous view, no transpose
    dtype = x.dtype
    itemsize = jnp.dtype(dtype).itemsize

    vmem_cap, budget = _device_limits()
    if hw_tile is None:
        hw_tile = _pick_hw_tile(C, HW, itemsize, budget)
    assert HW % hw_tile == 0 and (hw_tile % 128 == 0 or hw_tile == HW), hw_tile
    n_tiles = HW // hw_tile

    # Zero-pad only the tiny FC weights along the hidden dim (-> 128 multiple);
    # padded hidden units stay exactly zero through ReLU / the second FC.
    Hp = max(_round_up(hidden, 128), 128)
    w1p = jnp.pad(w1.astype(jnp.float32), ((0, Hp - hidden), (0, 0)))   # (Hp, C)
    w2p = jnp.pad(w2.astype(jnp.float32), ((0, 0), (0, Hp - hidden)))   # (C, Hp)

    block_bytes = C * hw_tile * itemsize
    x_bytes = B * HW * C * itemsize
    w_bytes = 2 * C * Hp * 4
    # Scoped-VMEM request: in/out double buffers + weights + accumulator + slack,
    # capped with headroom below physical capacity (v7x has only 64 MiB per TC).
    vmem_limit = int(max(8 << 20,
                         min(6 * block_bytes + 2 * w_bytes + (2 << 20),
                             vmem_cap - (12 << 20))))

    # ---- pass 1: global average pool + FC -> per-(B, C, 1) sigmoid scale ----
    scale = pl.pallas_call(
        functools.partial(_se_pool_fc_kernel, inv_hw=1.0 / HW),
        grid=(B, n_tiles),
        in_specs=[
            pl.BlockSpec((1, C, hw_tile), lambda b, t: (b, 0, t)),
            pl.BlockSpec((Hp, C), lambda b, t: (0, 0)),
            pl.BlockSpec((C, Hp), lambda b, t: (0, 0)),
        ],
        out_specs=pl.BlockSpec((1, C, 1), lambda b, t: (b, 0, 0)),  # resident accumulator
        out_shape=jax.ShapeDtypeStruct((B, C, 1), jnp.float32),
        compiler_params=pltpu.CompilerParams(
            dimension_semantics=("parallel", "arbitrary"),   # batch parallel, HW reduction
            vmem_limit_bytes=vmem_limit),
        cost_estimate=pl.CostEstimate(
            flops=B * HW * C + 4 * B * C * Hp,
            transcendentals=B * C,
            bytes_accessed=x_bytes + w_bytes + B * C * 4),
        interpret=interpret,
    )(x, w1p, w2p)

    # ---- pass 2: channel-wise rescale, fully independent tiles ----
    out = pl.pallas_call(
        _se_apply_kernel,
        grid=(B, n_tiles),
        in_specs=[
            pl.BlockSpec((1, C, hw_tile), lambda b, t: (b, 0, t)),
            pl.BlockSpec((1, C, 1), lambda b, t: (b, 0, 0)),
        ],
        out_specs=pl.BlockSpec((1, C, hw_tile), lambda b, t: (b, 0, t)),
        out_shape=jax.ShapeDtypeStruct((B, C, HW), dtype),
        compiler_params=pltpu.CompilerParams(
            dimension_semantics=("parallel", "parallel"),
            vmem_limit_bytes=vmem_limit),
        cost_estimate=pl.CostEstimate(
            flops=B * HW * C,
            transcendentals=0,
            bytes_accessed=2 * x_bytes + B * C * 4),
        interpret=interpret,
    )(x, scale)

    return out.reshape(B, C, H, W)               # free contiguous view


# ----------------------------- params & reference -----------------------------

def init_se_layer(key, channel, reduction=16):
    hidden = channel // reduction
    k1, k2 = jax.random.split(key)
    # Native nn.Linear layouts: fc[0].weight is (hidden, C), fc[2].weight is (C, hidden).
    w1 = jax.random.normal(k1, (hidden, channel), jnp.float32) * jnp.sqrt(1.0 / channel)
    w2 = jax.random.normal(k2, (channel, hidden), jnp.float32) * jnp.sqrt(1.0 / hidden)
    return {"w1": w1, "w2": w2}


def se_layer_reference(params, x_nchw):
    y = jnp.mean(x_nchw, axis=(2, 3))                          # (B, C) avg pool
    h = jnp.maximum(y @ params["w1"].T, 0.0)                   # FC + ReLU
    s = jax.nn.sigmoid(h @ params["w2"].T)                     # FC + sigmoid
    return x_nchw * s[:, :, None, None]


if __name__ == "__main__":
    key = jax.random.PRNGKey(0)
    kp, kx = jax.random.split(key)

    # channel must be >= reduction for a non-degenerate SE bottleneck:
    # B=2, C=64, H=W=16, reduction=16 -> hidden=4.
    B, C, H, W = 2, 64, 16, 16
    params = init_se_layer(kp, C, reduction=16)
    x = jax.random.normal(kx, (B, C, H, W), jnp.float32)

    # hw_tile=128 forces a 2-step reduction grid so the accumulator path is exercised.
    fwd = jax.jit(functools.partial(se_layer_forward, hw_tile=128))
    out = fwd(params, x)
    jax.block_until_ready(out)

    ref = se_layer_reference(params, x)
    assert out.shape == x.shape, out.shape
    assert bool(jnp.all(jnp.isfinite(out)))
    max_err = float(jnp.max(jnp.abs(out - ref)))
    assert max_err < 1e-2, max_err
    print("KERNEL_OK")
</pallas_src>

<mosaic_0001>
module attributes {stable_mosaic.version = 11 : i64} {
  func.func @_se_pool_fc_kernel(%arg0: i32, %arg1: i32, %arg2: memref<1x64x128xf32, #tpu.memory_space<vmem>>, %arg3: memref<128x64xf32, #tpu.memory_space<vmem>>, %arg4: memref<64x128xf32, #tpu.memory_space<vmem>>, %arg5: memref<1x64x1xf32, #tpu.memory_space<vmem>>) attributes {dimension_semantics = [#tpu.dimension_semantics<parallel>, #tpu.dimension_semantics<arbitrary>], iteration_bounds = array<i64: 2, 2>, scalar_prefetch = 0 : i64, scratch_operands = 0 : i64, tpu.core_type = #tpu.core_type<tc>, window_params = [{transform_indices = @transform_0, window_bounds = array<i64: 1, 64, 128>}, {pipeline_mode = #tpu.pipeline_mode<synchronous>, transform_indices = @transform_1, window_bounds = array<i64: 128, 64>}, {pipeline_mode = #tpu.pipeline_mode<synchronous>, transform_indices = @transform_2, window_bounds = array<i64: 64, 128>}, {transform_indices = @transform_3, window_bounds = array<i64: 1, 64, 1>}]} {
    %c0_i32 = arith.constant 0 : i32
    %0 = arith.cmpi eq, %arg1, %c0_i32 : i32
    %1 = arith.extui %0 : i1 to i32
    %c0_i32_0 = arith.constant 0 : i32
    %2 = arith.cmpi ne, %1, %c0_i32_0 : i32
    scf.if %2 {
      %cst_10 = arith.constant 0.000000e+00 : f32
      %12 = vector.broadcast %cst_10 : f32 to vector<1x64x1xf32>
      %c0_11 = arith.constant 0 : index
      %c0_12 = arith.constant 0 : index
      %c0_13 = arith.constant 0 : index
      %13 = vector.load %arg5[%c0_11, %c0_12, %c0_13] : memref<1x64x1xf32, #tpu.memory_space<vmem>>, vector<1x64x1xf32>
      tpu.vector_store %arg5[%c0_11, %c0_12, %c0_13], %12 {strides = array<i32>} : memref<1x64x1xf32, #tpu.memory_space<vmem>>, vector<1x64x1xf32>,
    } else {
    }
    %c0 = arith.constant 0 : index
    %c0_1 = arith.constant 0 : index
    %c0_2 = arith.constant 0 : index
    %3 = vector.load %arg5[%c0, %c0_1, %c0_2] : memref<1x64x1xf32, #tpu.memory_space<vmem>>, vector<1x64x1xf32>
    %c0_3 = arith.constant 0 : index
    %c0_4 = arith.constant 0 : index
    %c0_5 = arith.constant 0 : index
    %4 = vector.load %arg2[%c0_3, %c0_4, %c0_5] : memref<1x64x128xf32, #tpu.memory_space<vmem>>, vector<1x64x128xf32>
    %cst = arith.constant dense<0.000000e+00> : vector<1x64xf32>
    %5 = vector.multi_reduction <add>, %4, %cst [2] : vector<1x64x128xf32> to vector<1x64xf32>
    %6 = vector.shape_cast %5 : vector<1x64xf32> to vector<1x64x1xf32>
    %7 = arith.addf %3, %6 : vector<1x64x1xf32>
    %c0_6 = arith.constant 0 : index
    %c0_7 = arith.constant 0 : index
    %c0_8 = arith.constant 0 : index
    %8 = vector.load %arg5[%c0_6, %c0_7, %c0_8] : memref<1x64x1xf32, #tpu.memory_space<vmem>>, vector<1x64x1xf32>
    tpu.vector_store %arg5[%c0_6, %c0_7, %c0_8], %7 {strides = array<i32>} : memref<1x64x1xf32, #tpu.memory_space<vmem>>, vector<1x64x1xf32>,
    %c1_i32 = arith.constant 1 : i32
    %9 = arith.cmpi eq, %arg1, %c1_i32 : i32
    %10 = arith.extui %9 : i1 to i32
    %c0_i32_9 = arith.constant 0 : i32
    %11 = arith.cmpi ne, %10, %c0_i32_9 : i32
    scf.if %11 {
      %c0_10 = arith.constant 0 : index
      %c0_11 = arith.constant 0 : index
      %c0_12 = arith.constant 0 : index
      %12 = vector.load %arg5[%c0_10, %c0_11, %c0_12] : memref<1x64x1xf32, #tpu.memory_space<vmem>>, vector<1x64x1xf32>
      %13 = vector.shape_cast %12 : vector<1x64x1xf32> to vector<64x1xf32>
      %cst_13 = arith.constant 3.906250e-03 : f32
      %14 = vector.broadcast %cst_13 : f32 to vector<64x1xf32>
      %15 = arith.mulf %13, %14 : vector<64x1xf32>
      %c0_14 = arith.constant 0 : index
      %c0_15 = arith.constant 0 : index
      %16 = vector.load %arg3[%c0_14, %c0_15] : memref<128x64xf32, #tpu.memory_space<vmem>>, vector<128x64xf32>
      %cst_16 = arith.constant dense<0.000000e+00> : vector<128x1xf32>
      %17 = tpu.matmul %16, %15, %cst_16 {dimension_numbers = #tpu.dot_dimension_numbers<[1], [0], [0], [1], [0, 0, 1, 1], [], []>} : vector<128x64xf32>, vector<64x1xf32>, vector<128x1xf32> -> vector<128x1xf32>
      %cst_17 = arith.constant 0.000000e+00 : f32
      %18 = vector.broadcast %cst_17 : f32 to vector<128x1xf32>
      %19 = arith.maximumf %17, %18 : vector<128x1xf32>
      %c0_18 = arith.constant 0 : index
      %c0_19 = arith.constant 0 : index
      %20 = vector.load %arg4[%c0_18, %c0_19] : memref<64x128xf32, #tpu.memory_space<vmem>>, vector<64x128xf32>
      %cst_20 = arith.constant dense<0.000000e+00> : vector<64x1xf32>
      %21 = tpu.matmul %20, %19, %cst_20 {dimension_numbers = #tpu.dot_dimension_numbers<[1], [0], [0], [1], [0, 0, 1, 1], [], []>} : vector<64x128xf32>, vector<128x1xf32>, vector<64x1xf32> -> vector<64x1xf32>
      %22 = arith.negf %21 : vector<64x1xf32>
      %23 = math.exp %22 : vector<64x1xf32>
      %cst_21 = arith.constant 1.000000e+00 : f32
      %24 = vector.broadcast %cst_21 : f32 to vector<64x1xf32>
      %25 = arith.addf %24, %23 : vector<64x1xf32>
      %26 = arith.divf %24, %25 : vector<64x1xf32>
      %c0_22 = arith.constant 0 : index
      %c0_23 = arith.constant 0 : index
      %c0_24 = arith.constant 0 : index
      %27 = vector.load %arg5[%c0_22, %c0_23, %c0_24] : memref<1x64x1xf32, #tpu.memory_space<vmem>>, vector<1x64x1xf32>
      %28 = vector.shape_cast %27 : vector<1x64x1xf32> to vector<64x1xf32>
      %29 = vector.shape_cast %26 : vector<64x1xf32> to vector<1x64x1xf32>
      tpu.vector_store %arg5[%c0_22, %c0_23, %c0_24], %29 {strides = array<i32>} : memref<1x64x1xf32, #tpu.memory_space<vmem>>, vector<1x64x1xf32>,
    } else {
    }
    return
  }
  func.func @transform_0(%arg0: i32, %arg1: i32) -> (i32, i32, i32) {
    %c0_i32 = arith.constant 0 : i32
    %c0_i32_0 = arith.constant 0 : i32
    return %arg0, %c0_i32, %arg1 : i32, i32, i32
  }
  func.func @transform_1(%arg0: i32, %arg1: i32) -> (i32, i32) {
    %c0_i32 = arith.constant 0 : i32
    %c0_i32_0 = arith.constant 0 : i32
    %c0_i32_1 = arith.constant 0 : i32
    return %c0_i32, %c0_i32_0 : i32, i32
  }
  func.func @transform_2(%arg0: i32, %arg1: i32) -> (i32, i32) {
    %c0_i32 = arith.constant 0 : i32
    %c0_i32_0 = arith.constant 0 : i32
    %c0_i32_1 = arith.constant 0 : i32
    return %c0_i32, %c0_i32_0 : i32, i32
  }
  func.func @transform_3(%arg0: i32, %arg1: i32) -> (i32, i32, i32) {
    %c0_i32 = arith.constant 0 : i32
    %c0_i32_0 = arith.constant 0 : i32
    %c0_i32_1 = arith.constant 0 : i32
    return %arg0, %c0_i32, %c0_i32_0 : i32, i32, i32
  }
}

module attributes {stable_mosaic.version = 11 : i64} {
  func.func @_se_apply_kernel(%arg0: i32, %arg1: i32, %arg2: memref<1x64x128xf32, #tpu.memory_space<vmem>>, %arg3: memref<1x64x1xf32, #tpu.memory_space<vmem>>, %arg4: memref<1x64x128xf32, #tpu.memory_space<vmem>>) attributes {dimension_semantics = [#tpu.dimension_semantics<parallel>, #tpu.dimension_semantics<parallel>], iteration_bounds = array<i64: 2, 2>, scalar_prefetch = 0 : i64, scratch_operands = 0 : i64, tpu.core_type = #tpu.core_type<tc>, window_params = [{transform_indices = @transform_0, window_bounds = array<i64: 1, 64, 128>}, {transform_indices = @transform_1, window_bounds = array<i64: 1, 64, 1>}, {transform_indices = @transform_2, window_bounds = array<i64: 1, 64, 128>}]} {
    %c0 = arith.constant 0 : index
    %c0_0 = arith.constant 0 : index
    %c0_1 = arith.constant 0 : index
    %0 = vector.load %arg2[%c0, %c0_0, %c0_1] : memref<1x64x128xf32, #tpu.memory_space<vmem>>, vector<1x64x128xf32>
    %c0_2 = arith.constant 0 : index
    %c0_3 = arith.constant 0 : index
    %c0_4 = arith.constant 0 : index
    %1 = vector.load %arg3[%c0_2, %c0_3, %c0_4] : memref<1x64x1xf32, #tpu.memory_space<vmem>>, vector<1x64x1xf32>
    %2 = vector.broadcast %1 : vector<1x64x1xf32> to vector<1x64x128xf32>
    %3 = arith.mulf %0, %2 : vector<1x64x128xf32>
    %c0_5 = arith.constant 0 : index
    %c0_6 = arith.constant 0 : index
    %c0_7 = arith.constant 0 : index
    %4 = vector.load %arg4[%c0_5, %c0_6, %c0_7] : memref<1x64x128xf32, #tpu.memory_space<vmem>>, vector<1x64x128xf32>
    tpu.vector_store %arg4[%c0_5, %c0_6, %c0_7], %3 {strides = array<i32>} : memref<1x64x128xf32, #tpu.memory_space<vmem>>, vector<1x64x128xf32>,
    return
  }
  func.func @transform_0(%arg0: i32, %arg1: i32) -> (i32, i32, i32) {
    %c0_i32 = arith.constant 0 : i32
    %c0_i32_0 = arith.constant 0 : i32
    return %arg0, %c0_i32, %arg1 : i32, i32, i32
  }
  func.func @transform_1(%arg0: i32, %arg1: i32) -> (i32, i32, i32) {
    %c0_i32 = arith.constant 0 : i32
    %c0_i32_0 = arith.constant 0 : i32
    %c0_i32_1 = arith.constant 0 : i32
    return %arg0, %c0_i32, %c0_i32_0 : i32, i32, i32
  }
  func.func @transform_2(%arg0: i32, %arg1: i32) -> (i32, i32, i32) {
    %c0_i32 = arith.constant 0 : i32
    %c0_i32_0 = arith.constant 0 : i32
    return %arg0, %c0_i32, %arg1 : i32, i32, i32
  }
}

</mosaic_0001>

<llo_original>
// kernel: se_layer_forward.3
$region0: #{se_layer_forward.3}
  #allocation0 [shape = 'u32[]', space=smem, size = 0x4, offset = 0x4, fixed_abs, tag = 'smem constant byte address 0x4 - core index']
  #allocation1 [shape = 'u32[144,128]{1,0:T(1,128)}', space=vmem, size = 0x12000, scoped, tag = 'internal scratch']
  %s0 = inlined_call_operand.vmem [shape: f32[2,64,256], index: 0, kind: input, shape index: {}]
  %s1 = inlined_call_operand.vmem [shape: f32[2,64,1], index: 1, kind: input, shape index: {}]
  %s2 = inlined_call_operand.vmem [shape: f32[2,64,256], index: 2, kind: output, shape index: {}]
  %s3 = sld [smem:[#allocation0]]
  $region113: #{se_layer_forward.3} parent=0
    _
  %s5 = ssub.s32 1, %s3
  %s6 = scalar_select 0, %s5, %s3
  $region1: #{se_layer_forward.3} parent=0
    #allocation2 [shape = 'u8[65536]{0}', space=vmem, size = 0x10000, scoped, tag = 'input window, operand 0']
    #allocation3 [shape = 'u8[65536]{0}', space=vmem, size = 0x10000, scoped, tag = 'output window, operand 0']
    loop: start=0, step=1, limit=6
    $region2: #{se_layer_forward.3} parent=1 // loop_pre_header
      _
    $region3: #{se_layer_forward.3} parent=1 // loop_header
      %s8 = sphi 0, %s12
      %p9 = scmp.ge.s32.totalorder %s8, 6
      %s15 = sphi 0, %s27
      %s16 = sphi 0, %s23
      %s17 = sphi 0, %s15
      %s18 = sphi 0, %s16
      %s19 = sphi 0, %s17
      %s20 = sphi 0, %s18
      %s32 = sphi 0, %s34
      %s35 = sphi 0, %s32
      %s36 = sphi 0, %s35
      %s52 = sphi 0, %s36
      %s58 = sphi 0, %s60
      %s61 = sphi 0, %s58
      %s62 = sphi 0, %s61
      %s78 = sphi 0, %s62
      %s86 = sphi 0, %s88
      %s89 = sphi 0, %s86
      %s90 = sphi 0, %s89
      %s106 = sphi 0, %s90
    $region4: #{se_layer_forward.3} parent=1 // loop_header_branch
      %11 = sbr.rel (%p9) target = $region8
    $region5: #{se_layer_forward.3} parent=1 // loop_body
      %s13 = ssub.s32 %s8, 1
      %s14 = ssub.s32 %s8, 2
      %s21 = sadd.s32 1, %s16
      %p22 = scmp.ge.s32.totalorder %s21, 2
      %s23 = scalar_select %p22, 0, %s21
      %s24 = sadd.s32 1, %s15
      %s25 = scalar_select %p22, %s24, %s15
      %p26 = scmp.ge.s32.totalorder %s25, 2
      %s27 = scalar_select %p26, 0, %s25
      %s28 = ssub.s32 %s15, %s27
      %s29 = ssub.s32 %s16, %s23
      %s30 = sor.u32 %s28, %s29
      %p31 = scmp.eq.s32.totalorder %s30, 0
      %s33 = sadd.s32 %s32, 1
      %s34 = scalar_select %p31, %s32, %s33
      %p37 = pneg %p31
      %p38 = scmp.eq.s32.totalorder %s8, 3
      %p39 = por %p37, %p38
      %p40 = scmp.ne.s32.totalorder %s32, %s35
      %p41 = scmp.eq.s32.totalorder %s8, 0
      %p42 = por %p40, %p41
      %p43 = scmp.ne.s32.totalorder %s32, %s35
      %p44 = scmp.eq.s32.totalorder %s13, 3
      %p45 = por %p43, %p44
      %p46 = scmp.ne.s32.totalorder %s35, %s36
      %p47 = scmp.eq.s32.totalorder %s13, 0
      %p48 = por %p46, %p47
      %p49 = scmp.ne.s32.totalorder %s35, %s36
      %p50 = scmp.eq.s32.totalorder %s14, 3
      %p51 = por %p49, %p50
      %p53 = scmp.ne.s32.totalorder %s36, %s52
      %p54 = scmp.eq.s32.totalorder %s14, 0
      %p55 = por %p53, %p54
      %s56 = ssub.s32 %s15, %s27
      %p57 = scmp.eq.s32.totalorder %s56, 0
      %s59 = sadd.s32 %s58, 1
      %s60 = scalar_select %p57, %s58, %s59
      %p63 = pneg %p57
      %p64 = scmp.eq.s32.totalorder %s8, 3
      %p65 = por %p63, %p64
      %p66 = scmp.ne.s32.totalorder %s58, %s61
      %p67 = scmp.eq.s32.totalorder %s8, 0
      %p68 = por %p66, %p67
      %p69 = scmp.ne.s32.totalorder %s58, %s61
      %p70 = scmp.eq.s32.totalorder %s13, 3
      %p71 = por %p69, %p70
      %p72 = scmp.ne.s32.totalorder %s61, %s62
      %p73 = scmp.eq.s32.totalorder %s13, 0
      %p74 = por %p72, %p73
      %p75 = scmp.ne.s32.totalorder %s61, %s62
      %p76 = scmp.eq.s32.totalorder %s14, 3
      %p77 = por %p75, %p76
      %p79 = scmp.ne.s32.totalorder %s62, %s78
      %p80 = scmp.eq.s32.totalorder %s14, 0
      %p81 = por %p79, %p80
      %s82 = ssub.s32 %s15, %s27
      %s83 = ssub.s32 %s16, %s23
      %s84 = sor.u32 %s82, %s83
      %p85 = scmp.eq.s32.totalorder %s84, 0
      %s87 = sadd.s32 %s86, 1
      %s88 = scalar_select %p85, %s86, %s87
      %p91 = pneg %p85
      %p92 = scmp.eq.s32.totalorder %s8, 3
      %p93 = por %p91, %p92
      %p94 = scmp.ne.s32.totalorder %s86, %s89
      %p95 = scmp.eq.s32.totalorder %s8, 0
      %p96 = por %p94, %p95
      %p97 = scmp.ne.s32.totalorder %s86, %s89
      %p98 = scmp.eq.s32.totalorder %s13, 3
      %p99 = por %p97, %p98
      %p100 = scmp.ne.s32.totalorder %s89, %s90
      %p101 = scmp.eq.s32.totalorder %s13, 0
      %p102 = por %p100, %p101
      %p103 = scmp.ne.s32.totalorder %s89, %s90
      %p104 = scmp.eq.s32.totalorder %s14, 3
      %p105 = por %p103, %p104
      %p107 = scmp.ne.s32.totalorder %s90, %s106
      %p108 = scmp.eq.s32.totalorder %s14, 0
      %p109 = por %p107, %p108
      %p110 = scmp.le.s32.totalorder 1, %s8
      %p111 = scmp.lt.s32.totalorder %s8, 5
      %p112 = pnand %p110, %p111
      %p113 = pneg %p112
      // Predicated region
      $region9: #{se_layer_forward.3} parent=5 // pred_check
        _
      $region10: #{se_layer_forward.3} parent=5 // pred_check_branch
        %115 = sbr.rel (%p112) target = $region12
      $region11: #{se_layer_forward.3} parent=5 // pred_region
        %s116 = ssub.s32 %s8, 1
      $region12: #{se_layer_forward.3} parent=5 // pred_fallthru
        _
      %p117 = scmp.lt.s32.totalorder %s8, 4
      // Predicated region
      $region13: #{se_layer_forward.3} parent=5 // pred_check
        %p118 = pneg %p117
      $region14: #{se_layer_forward.3} parent=5 // pred_check_branch
        %120 = sbr.rel (%p118) target = $region16
      $region15: #{se_layer_forward.3} parent=5 // pred_region
        // Predicated region
        $region17: #{se_layer_forward.3} parent=15 // pred_check
          %p121 = pneg %p42
        $region18: #{se_layer_forward.3} parent=15 // pred_check_branch
          %123 = sbr.rel (%p121) target = $region20
        $region19: #{se_layer_forward.3} parent=15 // pred_region
          %s124 = sand.u32 %s32, 1
          %s125 = sand.u32 %s32, 1
          %s126 = smul.addr %s125, 64
          %s127 = scalar_lea.vmem [#allocation2], %s126
          %s128 = smul.addr %s15, 16
          %s129 = sadd.s32 %s16, %s128
          %s130 = smul.addr %s129, 8
          %s131 = scalar_lea.vmem %s0, %s130
          // Predicated region
          $region21: #{se_layer_forward.3} parent=19 // pred_check
            _
          $region22: #{se_layer_forward.3} parent=19 // pred_check_branch
            %133 = sbr.rel (0) target = $region24
          $region23: #{se_layer_forward.3} parent=19 // pred_region
            // Predicated region
            $region25: #{se_layer_forward.3} parent=23 // pred_check
              _
            $region26: #{se_layer_forward.3} parent=23 // pred_check_branch
              %135 = sbr.rel (0) target = $region28
            $region27: #{se_layer_forward.3} parent=23 // pred_region
              // Predicated region
              $region40: #{se_layer_forward.3} parent=27 // pred_check
                _
              $region41: #{se_layer_forward.3} parent=27 // pred_check_branch
                %164 = sbr.rel (0) target = $region43
              $region42: #{se_layer_forward.3} parent=27 // pred_region
                loop: start=0, step=1, limit=1
                $region44: #{se_layer_forward.3} parent=42 // loop_pre_header
                  _
                $region45: #{se_layer_forward.3} parent=42 // loop_header
                  %s166 = sphi 0, %s170
                  %p167 = scmp.ge.s32.totalorder %s166, 1
                  %s171 = sphi %s131, %s131
                  %s172 = sphi %s127, %s127
                $region46: #{se_layer_forward.3} parent=42 // loop_header_branch
                  %169 = sbr.rel (%p167) target = $region50
                $region47: #{se_layer_forward.3} parent=42 // loop_body
                  %v173 = vld [vmem:[%s171] sm:$0xff]
                  %174 = vst [vmem:[%s172] sm:$0xff] %v173
                  %v175 = vld [vmem:[%s171 + $0x10] sm:$0xff]
                  %176 = vst [vmem:[%s172 + $0x8] sm:$0xff] %v175
                  %v177 = vld [vmem:[%s171 + $0x20] sm:$0xff]
                  %178 = vst [vmem:[%s172 + $0x10] sm:$0xff] %v177
                  %v179 = vld [vmem:[%s171 + $0x30] sm:$0xff]
                  %180 = vst [vmem:[%s172 + $0x18] sm:$0xff] %v179
                  %v181 = vld [vmem:[%s171 + $0x40] sm:$0xff]
                  %182 = vst [vmem:[%s172 + $0x20] sm:$0xff] %v181
                  %v183 = vld [vmem:[%s171 + $0x50] sm:$0xff]
                  %184 = vst [vmem:[%s172 + $0x28] sm:$0xff] %v183
                  %v185 = vld [vmem:[%s171 + $0x60] sm:$0xff]
                  %186 = vst [vmem:[%s172 + $0x30] sm:$0xff] %v185
                  %v187 = vld [vmem:[%s171 + $0x70] sm:$0xff]
                  %188 = vst [vmem:[%s172 + $0x38] sm:$0xff] %v187
                $region48: #{se_layer_forward.3} parent=42 // loop_footer
                  %s170 = sadd.s32 1, %s166
                $region49: #{se_layer_forward.3} parent=42 // loop_footer_branch
                  %165 = sbr.rel target = $region45
                $region50: #{se_layer_forward.3} parent=42 // loop_exit
                  _
              $region43: #{se_layer_forward.3} parent=27 // pred_fallthru
                _
              // Predicated region
              $region51: #{se_layer_forward.3} parent=27 // pred_check
                _
              $region52: #{se_layer_forward.3} parent=27 // pred_check_branch
                %190 = sbr.rel target = $region54
              $region53: #{se_layer_forward.3} parent=27 // pred_region
                _
              $region54: #{se_layer_forward.3} parent=27 // pred_fallthru
                _
            $region28: #{se_layer_forward.3} parent=23 // pred_fallthru
              _
            // Predicated region
            $region29: #{se_layer_forward.3} parent=23 // pred_check
              _
            $region30: #{se_layer_forward.3} parent=23 // pred_check_branch
              %137 = sbr.rel target = $region32
            $region31: #{se_layer_forward.3} parent=23 // pred_region
              loop: start=0, step=1, limit=1
              $region33: #{se_layer_forward.3} parent=31 // loop_pre_header
                _
              $region34: #{se_layer_forward.3} parent=31 // loop_header
                %s140 = sphi 0, %s144
                %p141 = scmp.ge.s32.totalorder %s140, 1
                %s145 = sphi %s131, %s131
                %s146 = sphi %s127, %s127
              $region35: #{se_layer_forward.3} parent=31 // loop_header_branch
                %143 = sbr.rel (%p141) target = $region39
              $region36: #{se_layer_forward.3} parent=31 // loop_body
                %v147 = vld [vmem:[%s145] sm:$0xff]
                %148 = vst [vmem:[%s146] sm:$0xff] %v147
                %v149 = vld [vmem:[%s145 + $0x10] sm:$0xff]
                %150 = vst [vmem:[%s146 + $0x8] sm:$0xff] %v149
                %v151 = vld [vmem:[%s145 + $0x20] sm:$0xff]
                %152 = vst [vmem:[%s146 + $0x10] sm:$0xff] %v151
                %v153 = vld [vmem:[%s145 + $0x30] sm:$0xff]
                %154 = vst [vmem:[%s146 + $0x18] sm:$0xff] %v153
                %v155 = vld [vmem:[%s145 + $0x40] sm:$0xff]
                %156 = vst [vmem:[%s146 + $0x20] sm:$0xff] %v155
                %v157 = vld [vmem:[%s145 + $0x50] sm:$0xff]
                %158 = vst [vmem:[%s146 + $0x28] sm:$0xff] %v157
                %v159 = vld [vmem:[%s145 + $0x60] sm:$0xff]
                %160 = vst [vmem:[%s146 + $0x30] sm:$0xff] %v159
                %v161 = vld [vmem:[%s145 + $0x70] sm:$0xff]
                %162 = vst [vmem:[%s146 + $0x38] sm:$0xff] %v161
              $region37: #{se_layer_forward.3} parent=31 // loop_footer
                %s144 = sadd.s32 1, %s140
              $region38: #{se_layer_forward.3} parent=31 // loop_footer_branch
                %139 = sbr.rel target = $region34
              $region39: #{se_layer_forward.3} parent=31 // loop_exit
                _
            $region32: #{se_layer_forward.3} parent=23 // pred_fallthru
              _
          $region24: #{se_layer_forward.3} parent=19 // pred_fallthru
            _
          %191 = vnop
        $region20: #{se_layer_forward.3} parent=15 // pred_fallthru
          _
        // Predicated region
        $region55: #{se_layer_forward.3} parent=15 // pred_check
          %p192 = pneg %p68
        $region56: #{se_layer_forward.3} parent=15 // pred_check_branch
          %194 = sbr.rel (%p192) target = $region58
        $region57: #{se_layer_forward.3} parent=15 // pred_region
          %p195 = scmp.lt.s32.totalorder %s15, 1
          %s196 = scalar_select %p195, %s15, 1
          %s197 = smul.addr %s196, 8
          %s198 = smul.addr %s197, 8
          %s199 = scalar_lea.vmem %s1, %s198
        $region58: #{se_layer_forward.3} parent=15 // pred_fallthru
          _
      $region16: #{se_layer_forward.3} parent=5 // pred_fallthru
        _
      %p200 = scmp.le.s32.totalorder 1, %s8
      %p201 = scmp.lt.s32.totalorder %s8, 5
      %p202 = pnand %p200, %p201
      %p203 = pneg %p202
      // Predicated region
      $region59: #{se_layer_forward.3} parent=5 // pred_check
        _
      $region60: #{se_layer_forward.3} parent=5 // pred_check_branch
        %205 = sbr.rel (%p202) target = $region62
      $region61: #{se_layer_forward.3} parent=5 // pred_region
        %s206 = ssub.s32 %s8, 1
        %s207 = sand.u32 %s35, 1
        %s208 = sand.u32 %s35, 1
        %s209 = smul.addr %s208, 64
        %s210 = scalar_lea.vmem [#allocation2], %s209
        // Predicated region
        $region63: #{se_layer_forward.3} parent=61 // pred_check
          %p211 = pneg %p48
        $region64: #{se_layer_forward.3} parent=61 // pred_check_branch
          %213 = sbr.rel (%p211) target = $region66
        $region65: #{se_layer_forward.3} parent=61 // pred_region
          _
        $region66: #{se_layer_forward.3} parent=61 // pred_fallthru
          _
        %s214 = sand.u32 %s35, 1
        %s215 = sand.u32 %s35, 1
        %s216 = smul.addr %s215, 64
        %s217 = scalar_lea.vmem [#allocation2], %s216
        %p218 = pneg %p48
        %p219 = pneg %p45
        %p220 = scmp.lt.s32.totalorder %s17, 1
        %s221 = scalar_select %p220, %s17, 1
        %s222 = smul.addr %s221, 8
        %s223 = smul.addr %s222, 8
        %s224 = scalar_lea.vmem %s1, %s223
        %p225 = pneg %p74
        %p226 = pneg %p71
        %p227 = pneg %p102
        %p228 = pneg %p99
        %s229 = sand.u32 %s89, 1
        %s230 = sand.u32 %s89, 1
        %s231 = smul.addr %s230, 64
        %s232 = scalar_lea.vmem [#allocation3], %s231
        %p233 = scmp.lt.s32.totalorder %s17, 1
        %s234 = scalar_select %p233, %s17, 1
        %s235 = smul.addr %s234, 8
        %s236 = smul.addr %s235, 8
        %s237 = scalar_lea.vmem %s1, %s236
        %v238 = vld [vmem:[%s210] sm:$0xff]
        %v239 = vld [vmem:[%s210 + $0x8] sm:$0xff]
        %v240 = vld [vmem:[%s210 + $0x10] sm:$0xff]
        %v241 = vld [vmem:[%s210 + $0x18] sm:$0xff]
        %v242 = vld [vmem:[%s210 + $0x20] sm:$0xff]
        %v243 = vld [vmem:[%s210 + $0x28] sm:$0xff]
        %v244 = vld [vmem:[%s210 + $0x30] sm:$0xff]
        %v245 = vld [vmem:[%s210 + $0x38] sm:$0xff]
        %v246 = vld [vmem:[%s237] sm:$0xff]
        %v247 = vld [vmem:[%s237 + $0x8] sm:$0xff]
        %v248 = vld [vmem:[%s237 + $0x10] sm:$0xff]
        %v249 = vld [vmem:[%s237 + $0x18] sm:$0xff]
        %v250 = vld [vmem:[%s237 + $0x20] sm:$0xff]
        %v251 = vld [vmem:[%s237 + $0x28] sm:$0xff]
        %v252 = vld [vmem:[%s237 + $0x30] sm:$0xff]
        %v253 = vld [vmem:[%s237 + $0x38] sm:$0xff]
        %255 = vset.pattern.permute.xlu0 0
        %256 = vperm.xlu0 %255, %v246
        %v257 = vpop.permute.xlu0 %256
        %260 = vset.pattern.permute.xlu0 0
        %261 = vperm.xlu0 %260, %v247
        %v262 = vpop.permute.xlu0 %261
        %265 = vset.pattern.permute.xlu0 0
        %266 = vperm.xlu0 %265, %v248
        %v267 = vpop.permute.xlu0 %266
        %270 = vset.pattern.permute.xlu0 0
        %271 = vperm.xlu0 %270, %v249
        %v272 = vpop.permute.xlu0 %271
        %275 = vset.pattern.permute.xlu0 0
        %276 = vperm.xlu0 %275, %v250
        %v277 = vpop.permute.xlu0 %276
        %280 = vset.pattern.permute.xlu0 0
        %281 = vperm.xlu0 %280, %v251
        %v282 = vpop.permute.xlu0 %281
        %285 = vset.pattern.permute.xlu0 0
        %286 = vperm.xlu0 %285, %v252
        %v287 = vpop.permute.xlu0 %286
        %290 = vset.pattern.permute.xlu0 0
        %291 = vperm.xlu0 %290, %v253
        %v292 = vpop.permute.xlu0 %291
        %v294 = vmul.f32 %v238, %v257
        %v295 = vmul.f32 %v239, %v262
        %v296 = vmul.f32 %v240, %v267
        %v297 = vmul.f32 %v241, %v272
        %v298 = vmul.f32 %v242, %v277
        %v299 = vmul.f32 %v243, %v282
        %v300 = vmul.f32 %v244, %v287
        %v301 = vmul.f32 %v245, %v292
        %302 = vst [vmem:[%s232] sm:$0xff] %v294
        %303 = vst [vmem:[%s232 + $0x8] sm:$0xff] %v295
        %304 = vst [vmem:[%s232 + $0x10] sm:$0xff] %v296
        %305 = vst [vmem:[%s232 + $0x18] sm:$0xff] %v297
        %306 = vst [vmem:[%s232 + $0x20] sm:$0xff] %v298
        %307 = vst [vmem:[%s232 + $0x28] sm:$0xff] %v299
        %308 = vst [vmem:[%s232 + $0x30] sm:$0xff] %v300
        %309 = vst [vmem:[%s232 + $0x38] sm:$0xff] %v301
        %s310 = sand.u32 %s89, 1
        %s311 = sand.u32 %s89, 1
        %s312 = smul.addr %s311, 64
        %s313 = scalar_lea.vmem [#allocation3], %s312
        // Predicated region
        $region67: #{se_layer_forward.3} parent=61 // pred_check
          %p314 = pneg %p99
        $region68: #{se_layer_forward.3} parent=61 // pred_check_branch
          %316 = sbr.rel (%p314) target = $region70
        $region69: #{se_layer_forward.3} parent=61 // pred_region
          %s317 = smul.addr %s17, 16
          %s318 = sadd.s32 %s18, %s317
          %s319 = smul.addr %s318, 8
          %s320 = scalar_lea.vmem %s2, %s319
          // Predicated region
          $region71: #{se_layer_forward.3} parent=69 // pred_check
            _
          $region72: #{se_layer_forward.3} parent=69 // pred_check_branch
            %322 = sbr.rel (0) target = $region74
          $region73: #{se_layer_forward.3} parent=69 // pred_region
            // Predicated region
            $region75: #{se_layer_forward.3} parent=73 // pred_check
              _
            $region76: #{se_layer_forward.3} parent=73 // pred_check_branch
              %324 = sbr.rel (0) target = $region78
            $region77: #{se_layer_forward.3} parent=73 // pred_region
              // Predicated region
              $region90: #{se_layer_forward.3} parent=77 // pred_check
                _
              $region91: #{se_layer_forward.3} parent=77 // pred_check_branch
                %353 = sbr.rel (0) target = $region93
              $region92: #{se_layer_forward.3} parent=77 // pred_region
                loop: start=0, step=1, limit=1
                $region94: #{se_layer_forward.3} parent=92 // loop_pre_header
                  _
                $region95: #{se_layer_forward.3} parent=92 // loop_header
                  %s355 = sphi 0, %s359
                  %p356 = scmp.ge.s32.totalorder %s355, 1
                  %s360 = sphi %s313, %s313
                  %s361 = sphi %s320, %s320
                $region96: #{se_layer_forward.3} parent=92 // loop_header_branch
                  %358 = sbr.rel (%p356) target = $region100
                $region97: #{se_layer_forward.3} parent=92 // loop_body
                  %v362 = vld [vmem:[%s360] sm:$0xff]
                  %363 = vst [vmem:[%s361] sm:$0xff] %v362
                  %v364 = vld [vmem:[%s360 + $0x8] sm:$0xff]
                  %365 = vst [vmem:[%s361 + $0x10] sm:$0xff] %v364
                  %v366 = vld [vmem:[%s360 + $0x10] sm:$0xff]
                  %367 = vst [vmem:[%s361 + $0x20] sm:$0xff] %v366
                  %v368 = vld [vmem:[%s360 + $0x18] sm:$0xff]
                  %369 = vst [vmem:[%s361 + $0x30] sm:$0xff] %v368
                  %v370 = vld [vmem:[%s360 + $0x20] sm:$0xff]
                  %371 = vst [vmem:[%s361 + $0x40] sm:$0xff] %v370
                  %v372 = vld [vmem:[%s360 + $0x28] sm:$0xff]
                  %373 = vst [vmem:[%s361 + $0x50] sm:$0xff] %v372
                  %v374 = vld [vmem:[%s360 + $0x30] sm:$0xff]
                  %375 = vst [vmem:[%s361 + $0x60] sm:$0xff] %v374
                  %v376 = vld [vmem:[%s360 + $0x38] sm:$0xff]
                  %377 = vst [vmem:[%s361 + $0x70] sm:$0xff] %v376
                $region98: #{se_layer_forward.3} parent=92 // loop_footer
                  %s359 = sadd.s32 1, %s355
                $region99: #{se_layer_forward.3} parent=92 // loop_footer_branch
                  %354 = sbr.rel target = $region95
                $region100: #{se_layer_forward.3} parent=92 // loop_exit
                  _
              $region93: #{se_layer_forward.3} parent=77 // pred_fallthru
                _
              // Predicated region
              $region101: #{se_layer_forward.3} parent=77 // pred_check
                _
              $region102: #{se_layer_forward.3} parent=77 // pred_check_branch
                %379 = sbr.rel target = $region104
              $region103: #{se_layer_forward.3} parent=77 // pred_region
                _
              $region104: #{se_layer_forward.3} parent=77 // pred_fallthru
                _
            $region78: #{se_layer_forward.3} parent=73 // pred_fallthru
              _
            // Predicated region
            $region79: #{se_layer_forward.3} parent=73 // pred_check
              _
            $region80: #{se_layer_forward.3} parent=73 // pred_check_branch
              %326 = sbr.rel target = $region82
            $region81: #{se_layer_forward.3} parent=73 // pred_region
              loop: start=0, step=1, limit=1
              $region83: #{se_layer_forward.3} parent=81 // loop_pre_header
                _
              $region84: #{se_layer_forward.3} parent=81 // loop_header
                %s329 = sphi 0, %s333
                %p330 = scmp.ge.s32.totalorder %s329, 1
                %s334 = sphi %s313, %s313
                %s335 = sphi %s320, %s320
              $region85: #{se_layer_forward.3} parent=81 // loop_header_branch
                %332 = sbr.rel (%p330) target = $region89
              $region86: #{se_layer_forward.3} parent=81 // loop_body
                %v336 = vld [vmem:[%s334] sm:$0xff]
                %337 = vst [vmem:[%s335] sm:$0xff] %v336
                %v338 = vld [vmem:[%s334 + $0x8] sm:$0xff]
                %339 = vst [vmem:[%s335 + $0x10] sm:$0xff] %v338
                %v340 = vld [vmem:[%s334 + $0x10] sm:$0xff]
                %341 = vst [vmem:[%s335 + $0x20] sm:$0xff] %v340
                %v342 = vld [vmem:[%s334 + $0x18] sm:$0xff]
                %343 = vst [vmem:[%s335 + $0x30] sm:$0xff] %v342
                %v344 = vld [vmem:[%s334 + $0x20] sm:$0xff]
                %345 = vst [vmem:[%s335 + $0x40] sm:$0xff] %v344
                %v346 = vld [vmem:[%s334 + $0x28] sm:$0xff]
                %347 = vst [vmem:[%s335 + $0x50] sm:$0xff] %v346
                %v348 = vld [vmem:[%s334 + $0x30] sm:$0xff]
                %349 = vst [vmem:[%s335 + $0x60] sm:$0xff] %v348
                %v350 = vld [vmem:[%s334 + $0x38] sm:$0xff]
                %351 = vst [vmem:[%s335 + $0x70] sm:$0xff] %v350
              $region87: #{se_layer_forward.3} parent=81 // loop_footer
                %s333 = sadd.s32 1, %s329
              $region88: #{se_layer_forward.3} parent=81 // loop_footer_branch
                %328 = sbr.rel target = $region84
              $region89: #{se_layer_forward.3} parent=81 // loop_exit
                _
            $region82: #{se_layer_forward.3} parent=73 // pred_fallthru
              _
          $region74: #{se_layer_forward.3} parent=69 // pred_fallthru
            _
          %380 = vnop
        $region70: #{se_layer_forward.3} parent=61 // pred_fallthru
          _
      $region62: #{se_layer_forward.3} parent=5 // pred_fallthru
        _
      %p381 = scmp.le.s32.totalorder 2, %s8
      // Predicated region
      $region105: #{se_layer_forward.3} parent=5 // pred_check
        %p382 = pneg %p381
      $region106: #{se_layer_forward.3} parent=5 // pred_check_branch
        %384 = sbr.rel (%p382) target = $region108
      $region107: #{se_layer_forward.3} parent=5 // pred_region
        %s385 = ssub.s32 %s8, 2
        // Predicated region
        $region109: #{se_layer_forward.3} parent=107 // pred_check
          %p386 = pneg %p105
        $region110: #{se_layer_forward.3} parent=107 // pred_check_branch
          %388 = sbr.rel (%p386) target = $region112
        $region111: #{se_layer_forward.3} parent=107 // pred_region
          %s389 = sand.u32 %s90, 1
          %s390 = sand.u32 %s90, 1
          %s391 = smul.addr %s390, 64
          %s392 = scalar_lea.vmem [#allocation3], %s391
        $region112: #{se_layer_forward.3} parent=107 // pred_fallthru
          _
      $region108: #{se_layer_forward.3} parent=5 // pred_fallthru
        _
    $region6: #{se_layer_forward.3} parent=1 // loop_footer
      %s12 = sadd.s32 1, %s8
    $region7: #{se_layer_forward.3} parent=1 // loop_footer_branch
      %7 = sbr.rel target = $region3
    $region8: #{se_layer_forward.3} parent=1 // loop_exit
      _

// kernel: se_layer_forward.2
$region0: #{se_layer_forward.2}
  #allocation0 [shape = 'u32[]', space=smem, size = 0x4, offset = 0x4, fixed_abs, tag = 'smem constant byte address 0x4 - core index']
  #allocation1 [shape = 'u32[144,128]{1,0:T(1,128)}', space=vmem, size = 0x12000, scoped, tag = 'internal scratch']
  %s0 = inlined_call_operand.vmem [shape: f32[2,64,256], index: 0, kind: input, shape index: {}]
  %s1 = inlined_call_operand.vmem [shape: f32[128,64], index: 1, kind: input, shape index: {}]
  %s2 = inlined_call_operand.vmem [shape: f32[64,128], index: 2, kind: input, shape index: {}]
  %s3 = inlined_call_operand.vmem [shape: f32[2,64,1], index: 3, kind: output, shape index: {}]
  %s4 = sld [smem:[#allocation0]]
  $region91: #{se_layer_forward.2} parent=0
    _
  %s6 = ssub.s32 1, %s4
  %s7 = scalar_select 0, %s6, %s4
  $region1: #{se_layer_forward.2} parent=0
    #allocation2 [shape = 'u8[65536]{0}', space=vmem, size = 0x10000, scoped, tag = 'input window, operand 0']
    loop: start=0, step=1, limit=6
    $region2: #{se_layer_forward.2} parent=1 // loop_pre_header
      _
    $region3: #{se_layer_forward.2} parent=1 // loop_header
      %s9 = sphi 0, %s13
      %p10 = scmp.ge.s32.totalorder %s9, 6
      %s16 = sphi 0, %s28
      %s17 = sphi 0, %s24
      %s18 = sphi 0, %s16
      %s19 = sphi 0, %s17
      %s20 = sphi 0, %s18
      %s21 = sphi 0, %s19
      %s33 = sphi 0, %s35
      %s36 = sphi 0, %s33
      %s37 = sphi 0, %s36
      %s53 = sphi 0, %s37
      %s57 = sphi 0, %s57
      %s59 = sphi 0, %s57
      %s60 = sphi 0, %s59
      %s74 = sphi 0, %s60
      %s78 = sphi 0, %s78
      %s80 = sphi 0, %s78
      %s81 = sphi 0, %s80
      %s95 = sphi 0, %s81
      %s101 = sphi 0, %s103
      %s104 = sphi 0, %s101
      %s105 = sphi 0, %s104
      %s121 = sphi 0, %s105
    $region4: #{se_layer_forward.2} parent=1 // loop_header_branch
      %12 = sbr.rel (%p10) target = $region8
    $region5: #{se_layer_forward.2} parent=1 // loop_body
      %s14 = ssub.s32 %s9, 1
      %s15 = ssub.s32 %s9, 2
      %s22 = sadd.s32 1, %s17
      %p23 = scmp.ge.s32.totalorder %s22, 2
      %s24 = scalar_select %p23, 0, %s22
      %s25 = sadd.s32 1, %s16
      %s26 = scalar_select %p23, %s25, %s16
      %p27 = scmp.ge.s32.totalorder %s26, 2
      %s28 = scalar_select %p27, 0, %s26
      %s29 = ssub.s32 %s16, %s28
      %s30 = ssub.s32 %s17, %s24
      %s31 = sor.u32 %s29, %s30
      %p32 = scmp.eq.s32.totalorder %s31, 0
      %s34 = sadd.s32 %s33, 1
      %s35 = scalar_select %p32, %s33, %s34
      %p38 = pneg %p32
      %p39 = scmp.eq.s32.totalorder %s9, 3
      %p40 = por %p38, %p39
      %p41 = scmp.ne.s32.totalorder %s33, %s36
      %p42 = scmp.eq.s32.totalorder %s9, 0
      %p43 = por %p41, %p42
      %p44 = scmp.ne.s32.totalorder %s33, %s36
      %p45 = scmp.eq.s32.totalorder %s14, 3
      %p46 = por %p44, %p45
      %p47 = scmp.ne.s32.totalorder %s36, %s37
      %p48 = scmp.eq.s32.totalorder %s14, 0
      %p49 = por %p47, %p48
      %p50 = scmp.ne.s32.totalorder %s36, %s37
      %p51 = scmp.eq.s32.totalorder %s15, 3
      %p52 = por %p50, %p51
      %p54 = scmp.ne.s32.totalorder %s37, %s53
      %p55 = scmp.eq.s32.totalorder %s15, 0
      %p56 = por %p54, %p55
      %s58 = sadd.s32 %s57, 1
      %p61 = scmp.eq.s32.totalorder %s9, 3
      %p62 = scmp.ne.s32.totalorder %s57, %s59
      %p63 = scmp.eq.s32.totalorder %s9, 0
      %p64 = por %p62, %p63
      %p65 = scmp.ne.s32.totalorder %s57, %s59
      %p66 = scmp.eq.s32.totalorder %s14, 3
      %p67 = por %p65, %p66
      %p68 = scmp.ne.s32.totalorder %s59, %s60
      %p69 = scmp.eq.s32.totalorder %s14, 0
      %p70 = por %p68, %p69
      %p71 = scmp.ne.s32.totalorder %s59, %s60
      %p72 = scmp.eq.s32.totalorder %s15, 3
      %p73 = por %p71, %p72
      %p75 = scmp.ne.s32.totalorder %s60, %s74
      %p76 = scmp.eq.s32.totalorder %s15, 0
      %p77 = por %p75, %p76
      %s79 = sadd.s32 %s78, 1
      %p82 = scmp.eq.s32.totalorder %s9, 3
      %p83 = scmp.ne.s32.totalorder %s78, %s80
      %p84 = scmp.eq.s32.totalorder %s9, 0
      %p85 = por %p83, %p84
      %p86 = scmp.ne.s32.totalorder %s78, %s80
      %p87 = scmp.eq.s32.totalorder %s14, 3
      %p88 = por %p86, %p87
      %p89 = scmp.ne.s32.totalorder %s80, %s81
      %p90 = scmp.eq.s32.totalorder %s14, 0
      %p91 = por %p89, %p90
      %p92 = scmp.ne.s32.totalorder %s80, %s81
      %p93 = scmp.eq.s32.totalorder %s15, 3
      %p94 = por %p92, %p93
      %p96 = scmp.ne.s32.totalorder %s81, %s95
      %p97 = scmp.eq.s32.totalorder %s15, 0
      %p98 = por %p96, %p97
      %s99 = ssub.s32 %s16, %s28
      %p100 = scmp.eq.s32.totalorder %s99, 0
      %s102 = sadd.s32 %s101, 1
      %s103 = scalar_select %p100, %s101, %s102
      %p106 = pneg %p100
      %p107 = scmp.eq.s32.totalorder %s9, 3
      %p108 = por %p106, %p107
      %p109 = scmp.ne.s32.totalorder %s101, %s104
      %p110 = scmp.eq.s32.totalorder %s9, 0
      %p111 = por %p109, %p110
      %p112 = scmp.ne.s32.totalorder %s101, %s104
      %p113 = scmp.eq.s32.totalorder %s14, 3
      %p114 = por %p112, %p113
      %p115 = scmp.ne.s32.totalorder %s104, %s105
      %p116 = scmp.eq.s32.totalorder %s14, 0
      %p117 = por %p115, %p116
      %p118 = scmp.ne.s32.totalorder %s104, %s105
      %p119 = scmp.eq.s32.totalorder %s15, 3
      %p120 = por %p118, %p119
      %p122 = scmp.ne.s32.totalorder %s105, %s121
      %p123 = scmp.eq.s32.totalorder %s15, 0
      %p124 = por %p122, %p123
      %p125 = scmp.le.s32.totalorder 1, %s9
      %p126 = scmp.lt.s32.totalorder %s9, 5
      %p127 = pnand %p125, %p126
      %p128 = pneg %p127
      // Predicated region
      $region9: #{se_layer_forward.2} parent=5 // pred_check
        _
      $region10: #{se_layer_forward.2} parent=5 // pred_check_branch
        %130 = sbr.rel (%p127) target = $region12
      $region11: #{se_layer_forward.2} parent=5 // pred_region
        %s131 = ssub.s32 %s9, 1
        // Predicated region
        $region13: #{se_layer_forward.2} parent=11 // pred_check
          %p132 = pneg %p70
        $region14: #{se_layer_forward.2} parent=11 // pred_check_branch
          %134 = sbr.rel (%p132) target = $region16
        $region15: #{se_layer_forward.2} parent=11 // pred_region
          _
        $region16: #{se_layer_forward.2} parent=11 // pred_fallthru
          _
        // Predicated region
        $region17: #{se_layer_forward.2} parent=11 // pred_check
          %p135 = pneg %p91
        $region18: #{se_layer_forward.2} parent=11 // pred_check_branch
          %137 = sbr.rel (%p135) target = $region20
        $region19: #{se_layer_forward.2} parent=11 // pred_region
          _
        $region20: #{se_layer_forward.2} parent=11 // pred_fallthru
          _
      $region12: #{se_layer_forward.2} parent=5 // pred_fallthru
        _
      %p138 = scmp.lt.s32.totalorder %s9, 4
      // Predicated region
      $region21: #{se_layer_forward.2} parent=5 // pred_check
        %p139 = pneg %p138
      $region22: #{se_layer_forward.2} parent=5 // pred_check_branch
        %141 = sbr.rel (%p139) target = $region24
      $region23: #{se_layer_forward.2} parent=5 // pred_region
        // Predicated region
        $region25: #{se_layer_forward.2} parent=23 // pred_check
          %p142 = pneg %p43
        $region26: #{se_layer_forward.2} parent=23 // pred_check_branch
          %144 = sbr.rel (%p142) target = $region28
        $region27: #{se_layer_forward.2} parent=23 // pred_region
          %s145 = sand.u32 %s33, 1
          %s146 = sand.u32 %s33, 1
          %s147 = smul.addr %s146, 64
          %s148 = scalar_lea.vmem [#allocation2], %s147
          %s149 = smul.addr %s16, 16
          %s150 = sadd.s32 %s17, %s149
          %s151 = smul.addr %s150, 8
          %s152 = scalar_lea.vmem %s0, %s151
          // Predicated region
          $region29: #{se_layer_forward.2} parent=27 // pred_check
            _
          $region30: #{se_layer_forward.2} parent=27 // pred_check_branch
            %154 = sbr.rel (0) target = $region32
          $region31: #{se_layer_forward.2} parent=27 // pred_region
            // Predicated region
            $region33: #{se_layer_forward.2} parent=31 // pred_check
              _
            $region34: #{se_layer_forward.2} parent=31 // pred_check_branch
              %156 = sbr.rel (0) target = $region36
            $region35: #{se_layer_forward.2} parent=31 // pred_region
              // Predicated region
              $region48: #{se_layer_forward.2} parent=35 // pred_check
                _
              $region49: #{se_layer_forward.2} parent=35 // pred_check_branch
                %185 = sbr.rel (0) target = $region51
              $region50: #{se_layer_forward.2} parent=35 // pred_region
                loop: start=0, step=1, limit=1
                $region52: #{se_layer_forward.2} parent=50 // loop_pre_header
                  _
                $region53: #{se_layer_forward.2} parent=50 // loop_header
                  %s187 = sphi 0, %s191
                  %p188 = scmp.ge.s32.totalorder %s187, 1
                  %s192 = sphi %s152, %s152
                  %s193 = sphi %s148, %s148
                $region54: #{se_layer_forward.2} parent=50 // loop_header_branch
                  %190 = sbr.rel (%p188) target = $region58
                $region55: #{se_layer_forward.2} parent=50 // loop_body
                  %v194 = vld [vmem:[%s192] sm:$0xff]
                  %195 = vst [vmem:[%s193] sm:$0xff] %v194
                  %v196 = vld [vmem:[%s192 + $0x10] sm:$0xff]
                  %197 = vst [vmem:[%s193 + $0x8] sm:$0xff] %v196
                  %v198 = vld [vmem:[%s192 + $0x20] sm:$0xff]
                  %199 = vst [vmem:[%s193 + $0x10] sm:$0xff] %v198
                  %v200 = vld [vmem:[%s192 + $0x30] sm:$0xff]
                  %201 = vst [vmem:[%s193 + $0x18] sm:$0xff] %v200
                  %v202 = vld [vmem:[%s192 + $0x40] sm:$0xff]
                  %203 = vst [vmem:[%s193 + $0x20] sm:$0xff] %v202
                  %v204 = vld [vmem:[%s192 + $0x50] sm:$0xff]
                  %205 = vst [vmem:[%s193 + $0x28] sm:$0xff] %v204
                  %v206 = vld [vmem:[%s192 + $0x60] sm:$0xff]
                  %207 = vst [vmem:[%s193 + $0x30] sm:$0xff] %v206
                  %v208 = vld [vmem:[%s192 + $0x70] sm:$0xff]
                  %209 = vst [vmem:[%s193 + $0x38] sm:$0xff] %v208
                $region56: #{se_layer_forward.2} parent=50 // loop_footer
                  %s191 = sadd.s32 1, %s187
                $region57: #{se_layer_forward.2} parent=50 // loop_footer_branch
                  %186 = sbr.rel target = $region53
                $region58: #{se_layer_forward.2} parent=50 // loop_exit
                  _
              $region51: #{se_layer_forward.2} parent=35 // pred_fallthru
                _
              // Predicated region
              $region59: #{se_layer_forward.2} parent=35 // pred_check
                _
              $region60: #{se_layer_forward.2} parent=35 // pred_check_branch
                %211 = sbr.rel target = $region62
              $region61: #{se_layer_forward.2} parent=35 // pred_region
                _
              $region62: #{se_layer_forward.2} parent=35 // pred_fallthru
                _
            $region36: #{se_layer_forward.2} parent=31 // pred_fallthru
              _
            // Predicated region
            $region37: #{se_layer_forward.2} parent=31 // pred_check
              _
            $region38: #{se_layer_forward.2} parent=31 // pred_check_branch
              %158 = sbr.rel target = $region40
            $region39: #{se_layer_forward.2} parent=31 // pred_region
              loop: start=0, step=1, limit=1
              $region41: #{se_layer_forward.2} parent=39 // loop_pre_header
                _
              $region42: #{se_layer_forward.2} parent=39 // loop_header
                %s161 = sphi 0, %s165
                %p162 = scmp.ge.s32.totalorder %s161, 1
                %s166 = sphi %s152, %s152
                %s167 = sphi %s148, %s148
              $region43: #{se_layer_forward.2} parent=39 // loop_header_branch
                %164 = sbr.rel (%p162) target = $region47
              $region44: #{se_layer_forward.2} parent=39 // loop_body
                %v168 = vld [vmem:[%s166] sm:$0xff]
                %169 = vst [vmem:[%s167] sm:$0xff] %v168
                %v170 = vld [vmem:[%s166 + $0x10] sm:$0xff]
                %171 = vst [vmem:[%s167 + $0x8] sm:$0xff] %v170
                %v172 = vld [vmem:[%s166 + $0x20] sm:$0xff]
                %173 = vst [vmem:[%s167 + $0x10] sm:$0xff] %v172
                %v174 = vld [vmem:[%s166 + $0x30] sm:$0xff]
                %175 = vst [vmem:[%s167 + $0x18] sm:$0xff] %v174
                %v176 = vld [vmem:[%s166 + $0x40] sm:$0xff]
                %177 = vst [vmem:[%s167 + $0x20] sm:$0xff] %v176
                %v178 = vld [vmem:[%s166 + $0x50] sm:$0xff]
                %179 = vst [vmem:[%s167 + $0x28] sm:$0xff] %v178
                %v180 = vld [vmem:[%s166 + $0x60] sm:$0xff]
                %181 = vst [vmem:[%s167 + $0x30] sm:$0xff] %v180
                %v182 = vld [vmem:[%s166 + $0x70] sm:$0xff]
                %183 = vst [vmem:[%s167 + $0x38] sm:$0xff] %v182
              $region45: #{se_layer_forward.2} parent=39 // loop_footer
                %s165 = sadd.s32 1, %s161
              $region46: #{se_layer_forward.2} parent=39 // loop_footer_branch
                %160 = sbr.rel target = $region42
              $region47: #{se_layer_forward.2} parent=39 // loop_exit
                _
            $region40: #{se_layer_forward.2} parent=31 // pred_fallthru
              _
          $region32: #{se_layer_forward.2} parent=27 // pred_fallthru
            _
          %212 = vnop
        $region28: #{se_layer_forward.2} parent=23 // pred_fallthru
          _
      $region24: #{se_layer_forward.2} parent=5 // pred_fallthru
        _
      %p213 = scmp.le.s32.totalorder 1, %s9
      %p214 = scmp.lt.s32.totalorder %s9, 5
      %p215 = pnand %p213, %p214
      %p216 = pneg %p215
      // Predicated region
      $region63: #{se_layer_forward.2} parent=5 // pred_check
        _
      $region64: #{se_layer_forward.2} parent=5 // pred_check_branch
        %218 = sbr.rel (%p215) target = $region66
      $region65: #{se_layer_forward.2} parent=5 // pred_region
        %s219 = ssub.s32 %s9, 1
        %s220 = sand.u32 %s36, 1
        %s221 = sand.u32 %s36, 1
        %s222 = smul.addr %s221, 64
        %s223 = scalar_lea.vmem [#allocation2], %s222
        // Predicated region
        $region67: #{se_layer_forward.2} parent=65 // pred_check
          %p224 = pneg %p49
        $region68: #{se_layer_forward.2} parent=65 // pred_check_branch
          %226 = sbr.rel (%p224) target = $region70
        $region69: #{se_layer_forward.2} parent=65 // pred_region
          _
        $region70: #{se_layer_forward.2} parent=65 // pred_fallthru
          _
        %s227 = sand.u32 %s36, 1
        %s228 = sand.u32 %s36, 1
        %s229 = smul.addr %s228, 64
        %s230 = scalar_lea.vmem [#allocation2], %s229
        %p231 = pneg %p49
        %p232 = pneg %p46
        %p233 = pneg %p70
        %p234 = pneg %p67
        %p235 = pneg %p91
        %p236 = pneg %p88
        %p237 = pneg %p117
        %p238 = pneg %p114
        %p239 = scmp.lt.s32.totalorder %s18, 1
        %s240 = scalar_select %p239, %s18, 1
        %s241 = smul.addr %s240, 8
        %s242 = smul.addr %s241, 8
        %s243 = scalar_lea.vmem %s3, %s242
        %p244 = scmp.lt.s32.totalorder %s18, 1
        %s245 = scalar_select %p244, %s18, 1
        %s246 = smul.addr %s245, 8
        %s247 = smul.addr %s246, 8
        %s248 = scalar_lea.vmem %s3, %s247
        %p249 = scmp.eq.s32.totalorder %s19, 0
        // Predicated region
        $region71: #{se_layer_forward.2} parent=65 // pred_check
          %p250 = pneg %p249
        $region72: #{se_layer_forward.2} parent=65 // pred_check_branch
          %252 = sbr.rel (%p250) target = $region74
        $region73: #{se_layer_forward.2} parent=65 // pred_region
          %vm253 = vcmask 7168
          %254 = vst.msk [vmem:[%s248] sm:$0xff] %vm253, 0.0
          %255 = vst.msk [vmem:[%s248 + $0x8] sm:$0xff] %vm253, 0.0
          %256 = vst.msk [vmem:[%s248 + $0x10] sm:$0xff] %vm253, 0.0
          %257 = vst.msk [vmem:[%s248 + $0x18] sm:$0xff] %vm253, 0.0
          %258 = vst.msk [vmem:[%s248 + $0x20] sm:$0xff] %vm253, 0.0
          %259 = vst.msk [vmem:[%s248 + $0x28] sm:$0xff] %vm253, 0.0
          %260 = vst.msk [vmem:[%s248 + $0x30] sm:$0xff] %vm253, 0.0
          %261 = vst.msk [vmem:[%s248 + $0x38] sm:$0xff] %vm253, 0.0
        $region74: #{se_layer_forward.2} parent=65 // pred_fallthru
          _
        %v262 = vld [vmem:[%s248] sm:$0xff]
        %v263 = vld [vmem:[%s248 + $0x8] sm:$0xff]
        %v264 = vld [vmem:[%s248 + $0x10] sm:$0xff]
        %v265 = vld [vmem:[%s248 + $0x18] sm:$0xff]
        %v266 = vld [vmem:[%s248 + $0x20] sm:$0xff]
        %v267 = vld [vmem:[%s248 + $0x28] sm:$0xff]
        %v268 = vld [vmem:[%s248 + $0x30] sm:$0xff]
        %v269 = vld [vmem:[%s248 + $0x38] sm:$0xff]
        %v270 = vld [vmem:[%s223] sm:$0xff]
        %v271 = vld [vmem:[%s223 + $0x8] sm:$0xff]
        %v272 = vld [vmem:[%s223 + $0x10] sm:$0xff]
        %v273 = vld [vmem:[%s223 + $0x18] sm:$0xff]
        %v274 = vld [vmem:[%s223 + $0x20] sm:$0xff]
        %v275 = vld [vmem:[%s223 + $0x28] sm:$0xff]
        %v276 = vld [vmem:[%s223 + $0x30] sm:$0xff]
        %v277 = vld [vmem:[%s223 + $0x38] sm:$0xff]
        %278 = vadd.xlane.f32.xlu0 %v270
        %v279 = vpop.xlane.xlu0 %278
        %280 = vadd.xlane.f32.xlu0 %v271
        %v281 = vpop.xlane.xlu0 %280
        %282 = vadd.xlane.f32.xlu0 %v272
        %v283 = vpop.xlane.xlu0 %282
        %284 = vadd.xlane.f32.xlu0 %v273
        %v285 = vpop.xlane.xlu0 %284
        %286 = vadd.xlane.f32.xlu0 %v274
        %v287 = vpop.xlane.xlu0 %286
        %288 = vadd.xlane.f32.xlu0 %v275
        %v289 = vpop.xlane.xlu0 %288
        %290 = vadd.xlane.f32.xlu0 %v276
        %v291 = vpop.xlane.xlu0 %290
        %292 = vadd.xlane.f32.xlu0 %v277
        %v293 = vpop.xlane.xlu0 %292
        %v294 = vadd.f32 %v262, %v279
        %v295 = vadd.f32 %v263, %v281
        %v296 = vadd.f32 %v264, %v283
        %v297 = vadd.f32 %v265, %v285
        %v298 = vadd.f32 %v266, %v287
        %v299 = vadd.f32 %v267, %v289
        %v300 = vadd.f32 %v268, %v291
        %v301 = vadd.f32 %v269, %v293
        %vm302 = vcmask 7168
        %303 = vst.msk [vmem:[%s248] sm:$0xff] %vm302, %v294
        %304 = vst.msk [vmem:[%s248 + $0x8] sm:$0xff] %vm302, %v295
        %305 = vst.msk [vmem:[%s248 + $0x10] sm:$0xff] %vm302, %v296
        %306 = vst.msk [vmem:[%s248 + $0x18] sm:$0xff] %vm302, %v297
        %307 = vst.msk [vmem:[%s248 + $0x20] sm:$0xff] %vm302, %v298
        %308 = vst.msk [vmem:[%s248 + $0x28] sm:$0xff] %vm302, %v299
        %309 = vst.msk [vmem:[%s248 + $0x30] sm:$0xff] %vm302, %v300
        %310 = vst.msk [vmem:[%s248 + $0x38] sm:$0xff] %vm302, %v301
        %p311 = scmp.eq.s32.totalorder %s19, 1
        // Predicated region
        $region75: #{se_layer_forward.2} parent=65 // pred_check
          %p312 = pneg %p311
        $region76: #{se_layer_forward.2} parent=65 // pred_check_branch
          %314 = sbr.rel (%p312) target = $region78
        $region77: #{se_layer_forward.2} parent=65 // pred_region
          %v315 = vld [vmem:[%s248] sm:$0xff]
          %v316 = vld [vmem:[%s248 + $0x8] sm:$0xff]
          %v317 = vld [vmem:[%s248 + $0x10] sm:$0xff]
          %v318 = vld [vmem:[%s248 + $0x18] sm:$0xff]
          %v319 = vld [vmem:[%s248 + $0x20] sm:$0xff]
          %v320 = vld [vmem:[%s248 + $0x28] sm:$0xff]
          %v321 = vld [vmem:[%s248 + $0x30] sm:$0xff]
          %v322 = vld [vmem:[%s248 + $0x38] sm:$0xff]
          %v323 = vmul.f32 %v315, 0.00390625
          %v324 = vmul.f32 %v316, 0.00390625
          %v325 = vmul.f32 %v317, 0.00390625
          %v326 = vmul.f32 %v318, 0.00390625
          %v327 = vmul.f32 %v319, 0.00390625
          %v328 = vmul.f32 %v320, 0.00390625
          %v329 = vmul.f32 %v321, 0.00390625
          %v330 = vmul.f32 %v322, 0.00390625
          %v331 = vld [vmem:[%s1] sm:$0xff]
          %v332 = vld [vmem:[%s1 + $0x8] sm:$0xff]
          %v333 = vld [vmem:[%s1 + $0x10] sm:$0xff]
          %v334 = vld [vmem:[%s1 + $0x18] sm:$0xff]
          %v335 = vld [vmem:[%s1 + $0x20] sm:$0xff]
          %v336 = vld [vmem:[%s1 + $0x28] sm:$0xff]
          %v337 = vld [vmem:[%s1 + $0x30] sm:$0xff]
          %v338 = vld [vmem:[%s1 + $0x38] sm:$0xff]
          %v339 = vld [vmem:[%s1 + $0x40] sm:$0xff]
          %v340 = vld [vmem:[%s1 + $0x48] sm:$0xff]
          %v341 = vld [vmem:[%s1 + $0x50] sm:$0xff]
          %v342 = vld [vmem:[%s1 + $0x58] sm:$0xff]
          %v343 = vld [vmem:[%s1 + $0x60] sm:$0xff]
          %v344 = vld [vmem:[%s1 + $0x68] sm:$0xff]
          %v345 = vld [vmem:[%s1 + $0x70] sm:$0xff]
          %v346 = vld [vmem:[%s1 + $0x78] sm:$0xff]
          %vm347 = vcmask 523264
          %v349 = vsel %vm347, %v331, 0
          %v352 = vsel %vm347, %v332, 0
          %v355 = vsel %vm347, %v333, 0
          %v358 = vsel %vm347, %v334, 0
          %v361 = vsel %vm347, %v335, 0
          %v364 = vsel %vm347, %v336, 0
          %v367 = vsel %vm347, %v337, 0
          %v370 = vsel %vm347, %v338, 0
          %v373 = vsel %vm347, %v339, 0
          %v376 = vsel %vm347, %v340, 0
          %v379 = vsel %vm347, %v341, 0
          %v382 = vsel %vm347, %v342, 0
          %v385 = vsel %vm347, %v343, 0
          %v388 = vsel %vm347, %v344, 0
          %v391 = vsel %vm347, %v345, 0
          %v394 = vsel %vm347, %v346, 0
          %396 = vmatprep.subr.mxu0 0.0
          %397 = vmatpush1.msra.mxu0 %v323
          %398 = vmatprep.subr.mxu0 0.0
          %399 = vmatpush1.msra.mxu0 %v324
          %400 = vmatprep.subr.mxu0 0.0
          %401 = vmatpush1.msra.mxu0 %v325
          %402 = vmatprep.subr.mxu0 0.0
          %403 = vmatpush1.msra.mxu0 %v326
          %404 = vmatprep.subr.mxu0 0.0
          %405 = vmatpush1.msra.mxu0 %v327
          %406 = vmatprep.subr.mxu0 0.0
          %407 = vmatpush1.msra.mxu0 %v328
          %408 = vmatprep.subr.mxu0 0.0
          %409 = vmatpush1.msra.mxu0 %v329
          %410 = vmatprep.subr.mxu0 0.0
          %411 = vmatpush1.msra.mxu0 %v330
          %412 = vmatprep.subr.mxu0 0.0
          %413 = vmatpush1.msra.mxu0 0.0
          %414 = vmatprep.subr.mxu0 0.0
          %415 = vmatpush1.msra.mxu0 0.0
          %416 = vmatprep.subr.mxu0 0.0
          %417 = vmatpush1.msra.mxu0 0.0
          %418 = vmatprep.subr.mxu0 0.0
          %419 = vmatpush1.msra.mxu0 0.0
          %420 = vmatprep.subr.mxu0 0.0
          %421 = vmatpush1.msra.mxu0 0.0
          %422 = vmatprep.subr.mxu0 0.0
          %423 = vmatpush1.msra.mxu0 0.0
          %424 = vmatprep.subr.mxu0 0.0
          %425 = vmatpush1.msra.mxu0 0.0
          %426 = vmatprep.subr.mxu0 0.0
          %427 = vmatpush1.msra.mxu0 0.0
          %428 = vmatprep.subr.mxu0 0.0
          %429 = vmatpush1.msra.mxu0 0.0
          %430 = vmatprep.subr.mxu0 0.0
          %431 = vmatpush1.msra.mxu0 0.0
          %432 = vmatprep.subr.mxu0 0.0
          %433 = vmatpush1.msra.mxu0 0.0
          %434 = vmatprep.subr.mxu0 0.0
          %435 = vmatpush1.msra.mxu0 0.0
          %436 = vmatprep.subr.mxu0 0.0
          %437 = vmatpush1.msra.mxu0 0.0
          %438 = vmatprep.subr.mxu0 0.0
          %439 = vmatpush1.msra.mxu0 0.0
          %440 = vmatprep.subr.mxu0 0.0
          %441 = vmatpush1.msra.mxu0 0.0
          %442 = vmatprep.subr.mxu0 0.0
          %443 = vmatpush1.msra.mxu0 0.0
          %444 = vmatprep.subr.mxu0 0.0
          %445 = vmatpush1.msra.mxu0 0.0
          %446 = vmatprep.subr.mxu0 0.0
          %447 = vmatpush1.msra.mxu0 0.0
          %448 = vmatprep.subr.mxu0 0.0
          %449 = vmatpush1.msra.mxu0 0.0
          %450 = vmatprep.subr.mxu0 0.0
          %451 = vmatpush1.msra.mxu0 0.0
          %452 = vmatprep.subr.mxu0 0.0
          %453 = vmatpush1.msra.mxu0 0.0
          %454 = vmatprep.subr.mxu0 0.0
          %455 = vmatpush1.msra.mxu0 0.0
          %456 = vmatprep.subr.mxu0 0.0
          %457 = vmatpush1.msra.mxu0 0.0
          %458 = vmatprep.subr.mxu0 0.0
          %459 = vmatpush1.msra.mxu0 0.0
          %460 = vmatprep.mubr.f32.mxu0 0.0
          %461 = vmatmul.mubr.f32.gmra.mrb[0].mxu0 %v349
          %v462 = vpop.f32.mrb[0].mxu0
          %v463 = vadd.f32 0.0, %v462
          %v464 = vpop.f32.mrb[0].mxu0
          %465 = vmatprep.mubr.f32.mxu0 0.0
          %466 = vmatmul.mubr.f32.gmra.mrb[0].mxu0 %v352
          %v467 = vpop.f32.mrb[0].mxu0
          %v468 = vadd.f32 0.0, %v467
          %v469 = vpop.f32.mrb[0].mxu0
          %470 = vmatprep.mubr.f32.mxu0 0.0
          %471 = vmatmul.mubr.f32.gmra.mrb[0].mxu0 %v355
          %v472 = vpop.f32.mrb[0].mxu0
          %v473 = vadd.f32 0.0, %v472
          %v474 = vpop.f32.mrb[0].mxu0
          %475 = vmatprep.mubr.f32.mxu0 0.0
          %476 = vmatmul.mubr.f32.gmra.mrb[0].mxu0 %v358
          %v477 = vpop.f32.mrb[0].mxu0
          %v478 = vadd.f32 0.0, %v477
          %v479 = vpop.f32.mrb[0].mxu0
          %480 = vmatprep.mubr.f32.mxu0 0.0
          %481 = vmatmul.mubr.f32.gmra.mrb[0].mxu0 %v361
          %v482 = vpop.f32.mrb[0].mxu0
          %v483 = vadd.f32 0.0, %v482
          %v484 = vpop.f32.mrb[0].mxu0
          %485 = vmatprep.mubr.f32.mxu0 0.0
          %486 = vmatmul.mubr.f32.gmra.mrb[0].mxu0 %v364
          %v487 = vpop.f32.mrb[0].mxu0
          %v488 = vadd.f32 0.0, %v487
          %v489 = vpop.f32.mrb[0].mxu0
          %490 = vmatprep.mubr.f32.mxu0 0.0
          %491 = vmatmul.mubr.f32.gmra.mrb[0].mxu0 %v367
          %v492 = vpop.f32.mrb[0].mxu0
          %v493 = vadd.f32 0.0, %v492
          %v494 = vpop.f32.mrb[0].mxu0
          %495 = vmatprep.mubr.f32.mxu0 0.0
          %496 = vmatmul.mubr.f32.gmra.mrb[0].mxu0 %v370
          %v497 = vpop.f32.mrb[0].mxu0
          %v498 = vadd.f32 0.0, %v497
          %v499 = vpop.f32.mrb[0].mxu0
          %500 = vmatprep.mubr.f32.mxu0 0.0
          %501 = vmatmul.mubr.f32.gmra.mrb[0].mxu0 %v373
          %v502 = vpop.f32.mrb[0].mxu0
          %v503 = vadd.f32 0.0, %v502
          %v504 = vpop.f32.mrb[0].mxu0
          %505 = vmatprep.mubr.f32.mxu0 0.0
          %506 = vmatmul.mubr.f32.gmra.mrb[0].mxu0 %v376
          %v507 = vpop.f32.mrb[0].mxu0
          %v508 = vadd.f32 0.0, %v507
          %v509 = vpop.f32.mrb[0].mxu0
          %510 = vmatprep.mubr.f32.mxu0 0.0
          %511 = vmatmul.mubr.f32.gmra.mrb[0].mxu0 %v379
          %v512 = vpop.f32.mrb[0].mxu0
          %v513 = vadd.f32 0.0, %v512
          %v514 = vpop.f32.mrb[0].mxu0
          %515 = vmatprep.mubr.f32.mxu0 0.0
          %516 = vmatmul.mubr.f32.gmra.mrb[0].mxu0 %v382
          %v517 = vpop.f32.mrb[0].mxu0
          %v518 = vadd.f32 0.0, %v517
          %v519 = vpop.f32.mrb[0].mxu0
          %520 = vmatprep.mubr.f32.mxu0 0.0
          %521 = vmatmul.mubr.f32.gmra.mrb[0].mxu0 %v385
          %v522 = vpop.f32.mrb[0].mxu0
          %v523 = vadd.f32 0.0, %v522
          %v524 = vpop.f32.mrb[0].mxu0
          %525 = vmatprep.mubr.f32.mxu0 0.0
          %526 = vmatmul.mubr.f32.gmra.mrb[0].mxu0 %v388
          %v527 = vpop.f32.mrb[0].mxu0
          %v528 = vadd.f32 0.0, %v527
          %v529 = vpop.f32.mrb[0].mxu0
          %530 = vmatprep.mubr.f32.mxu0 0.0
          %531 = vmatmul.mubr.f32.gmra.mrb[0].mxu0 %v391
          %v532 = vpop.f32.mrb[0].mxu0
          %v533 = vadd.f32 0.0, %v532
          %v534 = vpop.f32.mrb[0].mxu0
          %535 = vmatprep.mubr.f32.mxu0 0.0
          %536 = vmatmul.mubr.f32.gmra.mrb[0].mxu0 %v394
          %v537 = vpop.f32.mrb[0].mxu0
          %v538 = vadd.f32 0.0, %v537
          %v539 = vpop.f32.mrb[0].mxu0
          %540 = vdwg.mxu0
          %v541 = vmax.f32 %v463, 0.0
          %v542 = vmax.f32 %v468, 0.0
          %v543 = vmax.f32 %v473, 0.0
          %v544 = vmax.f32 %v478, 0.0
          %v545 = vmax.f32 %v483, 0.0
          %v546 = vmax.f32 %v488, 0.0
          %v547 = vmax.f32 %v493, 0.0
          %v548 = vmax.f32 %v498, 0.0
          %v549 = vmax.f32 %v503, 0.0
          %v550 = vmax.f32 %v508, 0.0
          %v551 = vmax.f32 %v513, 0.0
          %v552 = vmax.f32 %v518, 0.0
          %v553 = vmax.f32 %v523, 0.0
          %v554 = vmax.f32 %v528, 0.0
          %v555 = vmax.f32 %v533, 0.0
          %v556 = vmax.f32 %v538, 0.0
          %v557 = vld [vmem:[%s2] sm:$0xff]
          %v558 = vld [vmem:[%s2 + $0x8] sm:$0xff]
          %v559 = vld [vmem:[%s2 + $0x10] sm:$0xff]
          %v560 = vld [vmem:[%s2 + $0x18] sm:$0xff]
          %v561 = vld [vmem:[%s2 + $0x20] sm:$0xff]
          %v562 = vld [vmem:[%s2 + $0x28] sm:$0xff]
          %v563 = vld [vmem:[%s2 + $0x30] sm:$0xff]
          %v564 = vld [vmem:[%s2 + $0x38] sm:$0xff]
          %565 = vmatprep.subr.mxu0 0.0
          %566 = vmatpush1.msra.mxu0 %v541
          %567 = vmatprep.subr.mxu0 0.0
          %568 = vmatpush1.msra.mxu0 %v542
          %569 = vmatprep.subr.mxu0 0.0
          %570 = vmatpush1.msra.mxu0 %v543
          %571 = vmatprep.subr.mxu0 0.0
          %572 = vmatpush1.msra.mxu0 %v544
          %573 = vmatprep.subr.mxu0 0.0
          %574 = vmatpush1.msra.mxu0 %v545
          %575 = vmatprep.subr.mxu0 0.0
          %576 = vmatpush1.msra.mxu0 %v546
          %577 = vmatprep.subr.mxu0 0.0
          %578 = vmatpush1.msra.mxu0 %v547
          %579 = vmatprep.subr.mxu0 0.0
          %580 = vmatpush1.msra.mxu0 %v548
          %581 = vmatprep.subr.mxu0 0.0
          %582 = vmatpush1.msra.mxu0 %v549
          %583 = vmatprep.subr.mxu0 0.0
          %584 = vmatpush1.msra.mxu0 %v550
          %585 = vmatprep.subr.mxu0 0.0
          %586 = vmatpush1.msra.mxu0 %v551
          %587 = vmatprep.subr.mxu0 0.0
          %588 = vmatpush1.msra.mxu0 %v552
          %589 = vmatprep.subr.mxu0 0.0
          %590 = vmatpush1.msra.mxu0 %v553
          %591 = vmatprep.subr.mxu0 0.0
          %592 = vmatpush1.msra.mxu0 %v554
          %593 = vmatprep.subr.mxu0 0.0
          %594 = vmatpush1.msra.mxu0 %v555
          %595 = vmatprep.subr.mxu0 0.0
          %596 = vmatpush1.msra.mxu0 %v556
          %597 = vmatprep.subr.mxu0 0.0
          %598 = vmatpush1.msra.mxu0 0.0
          %599 = vmatprep.subr.mxu0 0.0
          %600 = vmatpush1.msra.mxu0 0.0
          %601 = vmatprep.subr.mxu0 0.0
          %602 = vmatpush1.msra.mxu0 0.0
          %603 = vmatprep.subr.mxu0 0.0
          %604 = vmatpush1.msra.mxu0 0.0
          %605 = vmatprep.subr.mxu0 0.0
          %606 = vmatpush1.msra.mxu0 0.0
          %607 = vmatprep.subr.mxu0 0.0
          %608 = vmatpush1.msra.mxu0 0.0
          %609 = vmatprep.subr.mxu0 0.0
          %610 = vmatpush1.msra.mxu0 0.0
          %611 = vmatprep.subr.mxu0 0.0
          %612 = vmatpush1.msra.mxu0 0.0
          %613 = vmatprep.subr.mxu0 0.0
          %614 = vmatpush1.msra.mxu0 0.0
          %615 = vmatprep.subr.mxu0 0.0
          %616 = vmatpush1.msra.mxu0 0.0
          %617 = vmatprep.subr.mxu0 0.0
          %618 = vmatpush1.msra.mxu0 0.0
          %619 = vmatprep.subr.mxu0 0.0
          %620 = vmatpush1.msra.mxu0 0.0
          %621 = vmatprep.subr.mxu0 0.0
          %622 = vmatpush1.msra.mxu0 0.0
          %623 = vmatprep.subr.mxu0 0.0
          %624 = vmatpush1.msra.mxu0 0.0
          %625 = vmatprep.subr.mxu0 0.0
          %626 = vmatpush1.msra.mxu0 0.0
          %627 = vmatprep.subr.mxu0 0.0
          %628 = vmatpush1.msra.mxu0 0.0
          %629 = vmatprep.mubr.f32.mxu0 0.0
          %630 = vmatmul.mubr.f32.gmra.mrb[0].mxu0 %v557
          %v631 = vpop.f32.mrb[0].mxu0
          %v632 = vadd.f32 0.0, %v631
          %v633 = vpop.f32.mrb[0].mxu0
          %634 = vmatprep.mubr.f32.mxu0 0.0
          %635 = vmatmul.mubr.f32.gmra.mrb[0].mxu0 %v558
          %v636 = vpop.f32.mrb[0].mxu0
          %v637 = vadd.f32 0.0, %v636
          %v638 = vpop.f32.mrb[0].mxu0
          %639 = vmatprep.mubr.f32.mxu0 0.0
          %640 = vmatmul.mubr.f32.gmra.mrb[0].mxu0 %v559
          %v641 = vpop.f32.mrb[0].mxu0
          %v642 = vadd.f32 0.0, %v641
          %v643 = vpop.f32.mrb[0].mxu0
          %644 = vmatprep.mubr.f32.mxu0 0.0
          %645 = vmatmul.mubr.f32.gmra.mrb[0].mxu0 %v560
          %v646 = vpop.f32.mrb[0].mxu0
          %v647 = vadd.f32 0.0, %v646
          %v648 = vpop.f32.mrb[0].mxu0
          %649 = vmatprep.mubr.f32.mxu0 0.0
          %650 = vmatmul.mubr.f32.gmra.mrb[0].mxu0 %v561
          %v651 = vpop.f32.mrb[0].mxu0
          %v652 = vadd.f32 0.0, %v651
          %v653 = vpop.f32.mrb[0].mxu0
          %654 = vmatprep.mubr.f32.mxu0 0.0
          %655 = vmatmul.mubr.f32.gmra.mrb[0].mxu0 %v562
          %v656 = vpop.f32.mrb[0].mxu0
          %v657 = vadd.f32 0.0, %v656
          %v658 = vpop.f32.mrb[0].mxu0
          %659 = vmatprep.mubr.f32.mxu0 0.0
          %660 = vmatmul.mubr.f32.gmra.mrb[0].mxu0 %v563
          %v661 = vpop.f32.mrb[0].mxu0
          %v662 = vadd.f32 0.0, %v661
          %v663 = vpop.f32.mrb[0].mxu0
          %664 = vmatprep.mubr.f32.mxu0 0.0
          %665 = vmatmul.mubr.f32.gmra.mrb[0].mxu0 %v564
          %v666 = vpop.f32.mrb[0].mxu0
          %v667 = vadd.f32 0.0, %v666
          %v668 = vpop.f32.mrb[0].mxu0
          %669 = vdwg.mxu0
          %v670 = vxor.u32 %v632, 2147483648
          %v671 = vxor.u32 %v637, 2147483648
          %v672 = vxor.u32 %v642, 2147483648
          %v673 = vxor.u32 %v647, 2147483648
          %v674 = vxor.u32 %v652, 2147483648
          %v675 = vxor.u32 %v657, 2147483648
          %v676 = vxor.u32 %v662, 2147483648
          %v677 = vxor.u32 %v667, 2147483648
          %v678 = vmul.f32 %v670, 1.442695
          %v679 = vpow.pop %v678
          %v680 = vmul.f32 %v671, 1.442695
          %v681 = vpow.pop %v680
          %v682 = vmul.f32 %v672, 1.442695
          %v683 = vpow.pop %v682
          %v684 = vmul.f32 %v673, 1.442695
          %v685 = vpow.pop %v684
          %v686 = vmul.f32 %v674, 1.442695
          %v687 = vpow.pop %v686
          %v688 = vmul.f32 %v675, 1.442695
          %v689 = vpow.pop %v688
          %v690 = vmul.f32 %v676, 1.442695
          %v691 = vpow.pop %v690
          %v692 = vmul.f32 %v677, 1.442695
          %v693 = vpow.pop %v692
          %v694 = vadd.f32 %v679, 1.0
          %v695 = vadd.f32 %v681, 1.0
          %v696 = vadd.f32 %v683, 1.0
          %v697 = vadd.f32 %v685, 1.0
          %v698 = vadd.f32 %v687, 1.0
          %v699 = vadd.f32 %v689, 1.0
          %v700 = vadd.f32 %v691, 1.0
          %v701 = vadd.f32 %v693, 1.0
          %v702 = vrcp.pop %v694
          %v703 = vmul.f32 1.0, %v702
          %v704 = vrcp.pop %v695
          %v705 = vmul.f32 1.0, %v704
          %v706 = vrcp.pop %v696
          %v707 = vmul.f32 1.0, %v706
          %v708 = vrcp.pop %v697
          %v709 = vmul.f32 1.0, %v708
          %v710 = vrcp.pop %v698
          %v711 = vmul.f32 1.0, %v710
          %v712 = vrcp.pop %v699
          %v713 = vmul.f32 1.0, %v712
          %v714 = vrcp.pop %v700
          %v715 = vmul.f32 1.0, %v714
          %v716 = vrcp.pop %v701
          %v717 = vmul.f32 1.0, %v716
          %718 = vst.msk [vmem:[%s248] sm:$0xff] %vm302, %v703
          %719 = vst.msk [vmem:[%s248 + $0x8] sm:$0xff] %vm302, %v705
          %720 = vst.msk [vmem:[%s248 + $0x10] sm:$0xff] %vm302, %v707
          %721 = vst.msk [vmem:[%s248 + $0x18] sm:$0xff] %vm302, %v709
          %722 = vst.msk [vmem:[%s248 + $0x20] sm:$0xff] %vm302, %v711
          %723 = vst.msk [vmem:[%s248 + $0x28] sm:$0xff] %vm302, %v713
          %724 = vst.msk [vmem:[%s248 + $0x30] sm:$0xff] %vm302, %v715
          %725 = vst.msk [vmem:[%s248 + $0x38] sm:$0xff] %vm302, %v717
        $region78: #{se_layer_forward.2} parent=65 // pred_fallthru
          _
        %p726 = scmp.lt.s32.totalorder %s18, 1
        %s727 = scalar_select %p726, %s18, 1
        %s728 = smul.addr %s727, 8
        %s729 = smul.addr %s728, 8
        %s730 = scalar_lea.vmem %s3, %s729
        // Predicated region
        $region79: #{se_layer_forward.2} parent=65 // pred_check
          %p731 = pneg %p114
        $region80: #{se_layer_forward.2} parent=65 // pred_check_branch
          %733 = sbr.rel (%p731) target = $region82
        $region81: #{se_layer_forward.2} parent=65 // pred_region
          _
        $region82: #{se_layer_forward.2} parent=65 // pred_fallthru
          _
      $region66: #{se_layer_forward.2} parent=5 // pred_fallthru
        _
      %p734 = scmp.le.s32.totalorder 2, %s9
      // Predicated region
      $region83: #{se_layer_forward.2} parent=5 // pred_check
        %p735 = pneg %p734
      $region84: #{se_layer_forward.2} parent=5 // pred_check_branch
        %737 = sbr.rel (%p735) target = $region86
      $region85: #{se_layer_forward.2} parent=5 // pred_region
        %s738 = ssub.s32 %s9, 2
        // Predicated region
        $region87: #{se_layer_forward.2} parent=85 // pred_check
          %p739 = pneg %p120
        $region88: #{se_layer_forward.2} parent=85 // pred_check_branch
          %741 = sbr.rel (%p739) target = $region90
        $region89: #{se_layer_forward.2} parent=85 // pred_region
          %p742 = scmp.lt.s32.totalorder %s20, 1
          %s743 = scalar_select %p742, %s20, 1
          %s744 = smul.addr %s743, 8
          %s745 = smul.addr %s744, 8
          %s746 = scalar_lea.vmem %s3, %s745
        $region90: #{se_layer_forward.2} parent=85 // pred_fallthru
          _
      $region86: #{se_layer_forward.2} parent=5 // pred_fallthru
        _
    $region6: #{se_layer_forward.2} parent=1 // loop_footer
      %s13 = sadd.s32 1, %s9
    $region7: #{se_layer_forward.2} parent=1 // loop_footer_branch
      %8 = sbr.rel target = $region3
    $region8: #{se_layer_forward.2} parent=1 // loop_exit
      _

</llo_original>
